<compile_context>
chip_gen: v7x
topology: tpu7x:2x2x1
jax: 0.10.0
libtpu: 0.0.40
codegen_flags: <defaults>
</compile_context>

<pallas_src>
import functools

import jax
import jax.numpy as jnp
from jax import lax
from jax.experimental import pallas as pl
from jax.experimental.pallas import tpu as pltpu


def _yday_kernel(yday_ref, emb_ref, out_ref, *, num_nodes: int):
    """One grid step: (TN, 1) yday block -> (TN, C) output block.

    yday_ref: (TN, 1) f32 | emb_ref: (num_nodes, C) f32 | out_ref: (TN, C) f32
    """
    tn = out_ref.shape[0]

    scaled = yday_ref[...] * float(num_nodes)                 # (TN, 1)
    lower_f = jnp.floor(scaled)                               # (TN, 1)
    alpha = scaled - lower_f                                  # (TN, 1)
    # Clamp keeps yday==1.0 and edge-block padding rows well defined; indices
    # only feed compares (never memory), and padded output rows are masked on
    # the store anyway.
    lower = jnp.clip(lower_f.astype(jnp.int32), 0, num_nodes - 1)
    # compare+select instead of `(lower + 1) % num_nodes` (cheaper on the VPU).
    upper = jnp.where(lower == num_nodes - 1, 0, lower + 1)   # (TN, 1)

    node_ids = lax.broadcasted_iota(jnp.int32, (tn, num_nodes), 1)   # (TN, nn)
    # Fused weighted one-hot: gather + lerp collapses into one MXU matmul.
    w = (jnp.where(node_ids == lower, alpha, 0.0)
         + jnp.where(node_ids == upper, 1.0 - alpha, 0.0))           # (TN, nn)

    # (TN, nn) @ (nn, C) -> (TN, C): result lands directly in the module's
    # (sample, channel) layout, so no second HBM pass for a transpose.
    out_ref[...] = jnp.dot(w, emb_ref[...], preferred_element_type=jnp.float32)


def _round_up(x: int, m: int) -> int:
    return (x + m - 1) // m * m


def learned_yday_embedding(yday: jax.Array, embedding: jax.Array,
                           *, tile_samples: int = 2048) -> jax.Array:
    """Pallas equivalent of LearnedYearDayEmbedding.forward.

    yday: any shape, float32 values in [0, 1).
    embedding: (num_nodes, num_channels) float32 parameter.
    returns: (yday.size, num_channels) float32 (same layout as the module).
    tile_samples: max samples per grid step (multiple of 128 recommended).
    """
    num_nodes, num_channels = embedding.shape

    flat = yday.reshape(-1).astype(jnp.float32)        # torch .view(-1)
    n = int(flat.shape[0])

    max_tile = max(128, _round_up(tile_samples, 128))
    if n <= max_tile and n < 2048:
        # Single block; block dims equal the full array dims -> always legal.
        tile = n
    else:
        # Even number of near-equal steps -> balanced across v7x's 2 TCs.
        steps = max(2, pl.cdiv(n, max_tile))
        if steps % 2:
            steps += 1
        tile = min(_round_up(pl.cdiv(n, steps), 128), _round_up(n, 128))
    grid = (pl.cdiv(n, tile),)

    yday_col = flat.reshape(n, 1)                      # free metadata reshape
    emb = embedding.astype(jnp.float32)

    out = pl.pallas_call(
        functools.partial(_yday_kernel, num_nodes=num_nodes),
        out_shape=jax.ShapeDtypeStruct((n, num_channels), jnp.float32),
        grid_spec=pl.GridSpec(
            grid=grid,
            in_specs=[
                pl.BlockSpec((tile, 1), lambda i: (i, 0)),
                # Tiny constant table; same block index every step, so it is
                # not re-DMA'd per step.
                pl.BlockSpec((num_nodes, num_channels), lambda i: (0, 0)),
            ],
            out_specs=pl.BlockSpec((tile, num_channels), lambda i: (i, 0)),
        ),
        compiler_params=pltpu.CompilerParams(
            dimension_semantics=("parallel",),
            vmem_limit_bytes=32 * 1024 * 1024),
        cost_estimate=pl.CostEstimate(
            flops=2 * num_channels * num_nodes * n,
            transcendentals=0,
            bytes_accessed=4 * (n + num_nodes * num_channels
                                + n * num_channels)),
    )(yday_col, emb)

    return out


def _reference(yday, embedding):
    num_nodes = embedding.shape[0]
    scaled = (yday.astype(jnp.float32) * num_nodes).reshape(-1)
    lower = jnp.floor(scaled).astype(jnp.int32)
    upper = (lower + 1) % num_nodes
    alpha = (scaled - lower)[:, None]
    return alpha * embedding[lower] + (1.0 - alpha) * embedding[upper]


if __name__ == "__main__":
    num_channels = 10
    num_nodes = 12

    key = jax.random.PRNGKey(0)
    k_emb, k_small, k_big = jax.random.split(key, 3)

    # deterministic synthetic parameter: (rand(num_nodes, num_channels) - 0.5) / 10
    embedding = (jax.random.uniform(k_emb, (num_nodes, num_channels),
                                    dtype=jnp.float32) - 0.5) / 10.0

    # Case 1: small shape consistent with the module (batch=2, seq=8).
    yday_small = jax.random.uniform(k_small, (2, 8), dtype=jnp.float32,
                                    maxval=0.999)
    out_small = jax.block_until_ready(
        learned_yday_embedding(yday_small, embedding))
    ref_small = _reference(yday_small, embedding)
    assert out_small.shape == (yday_small.size, num_channels)
    assert jnp.allclose(out_small, ref_small, atol=1e-5, rtol=1e-5)

    # Case 2: multi-step grid with a partial edge block (N=3000, tile=512)
    # — exercises the even-step split and the masked edge-block path.
    yday_big = jax.random.uniform(k_big, (3, 1000), dtype=jnp.float32,
                                  maxval=0.999)
    out_big = jax.block_until_ready(
        learned_yday_embedding(yday_big, embedding, tile_samples=512))
    ref_big = _reference(yday_big, embedding)
    assert out_big.shape == (yday_big.size, num_channels)
    assert jnp.allclose(out_big, ref_big, atol=1e-5, rtol=1e-5)

    print("KERNEL_OK")
</pallas_src>

<mosaic_0001>
module attributes {stable_mosaic.version = 11 : i64} {
  func.func @_yday_kernel(%arg0: i32, %arg1: memref<16x1xf32, #tpu.memory_space<vmem>>, %arg2: memref<12x10xf32, #tpu.memory_space<vmem>>, %arg3: memref<16x10xf32, #tpu.memory_space<vmem>>) attributes {dimension_semantics = [#tpu.dimension_semantics<parallel>], iteration_bounds = array<i64: 1>, scalar_prefetch = 0 : i64, scratch_operands = 0 : i64, tpu.core_type = #tpu.core_type<tc>, window_params = [{transform_indices = @transform_0, window_bounds = array<i64: 16, 1>}, {pipeline_mode = #tpu.pipeline_mode<synchronous>, transform_indices = @transform_1, window_bounds = array<i64: 12, 10>}, {transform_indices = @transform_2, window_bounds = array<i64: 16, 10>}]} {
    %c0 = arith.constant 0 : index
    %c0_0 = arith.constant 0 : index
    %0 = vector.load %arg1[%c0, %c0_0] : memref<16x1xf32, #tpu.memory_space<vmem>>, vector<16x1xf32>
    %cst = arith.constant 1.200000e+01 : f32
    %1 = vector.broadcast %cst : f32 to vector<16x1xf32>
    %2 = arith.mulf %0, %1 : vector<16x1xf32>
    %3 = math.floor %2 : vector<16x1xf32>
    %4 = arith.subf %2, %3 : vector<16x1xf32>
    %5 = arith.fptosi %3 : vector<16x1xf32> to vector<16x1xi32>
    %c0_i32 = arith.constant 0 : i32
    %c11_i32 = arith.constant 11 : i32
    %6 = vector.broadcast %c0_i32 : i32 to vector<16x1xi32>
    %7 = arith.maxsi %6, %5 : vector<16x1xi32>
    %8 = vector.broadcast %c11_i32 : i32 to vector<16x1xi32>
    %9 = arith.minsi %8, %7 : vector<16x1xi32>
    %c11_i32_1 = arith.constant 11 : i32
    %10 = vector.broadcast %c11_i32_1 : i32 to vector<16x1xi32>
    %11 = arith.cmpi eq, %9, %10 : vector<16x1xi32>
    %c1_i32 = arith.constant 1 : i32
    %12 = vector.broadcast %c1_i32 : i32 to vector<16x1xi32>
    %13 = arith.addi %9, %12 : vector<16x1xi32>
    %c0_i32_2 = arith.constant 0 : i32
    %14 = vector.broadcast %c0_i32_2 : i32 to vector<16x1xi32>
    %15 = arith.select %11, %14, %13 : vector<16x1xi1>, vector<16x1xi32>
    %16 = tpu.iota {dimensions = array<i32: 1>} : vector<16x12xi32>
    %17 = vector.broadcast %9 : vector<16x1xi32> to vector<16x12xi32>
    %18 = arith.cmpi eq, %16, %17 : vector<16x12xi32>
    %cst_3 = arith.constant 0.000000e+00 : f32
    %19 = vector.shape_cast %4 : vector<16x1xf32> to vector<16x1xf32>
    %20 = vector.broadcast %19 : vector<16x1xf32> to vector<16x12xf32>
    %21 = vector.broadcast %cst_3 : f32 to vector<16x12xf32>
    %22 = arith.select %18, %20, %21 : vector<16x12xi1>, vector<16x12xf32>
    %23 = vector.broadcast %15 : vector<16x1xi32> to vector<16x12xi32>
    %24 = arith.cmpi eq, %16, %23 : vector<16x12xi32>
    %cst_4 = arith.constant 1.000000e+00 : f32
    %25 = vector.broadcast %cst_4 : f32 to vector<16x1xf32>
    %26 = arith.subf %25, %4 : vector<16x1xf32>
    %cst_5 = arith.constant 0.000000e+00 : f32
    %27 = vector.shape_cast %26 : vector<16x1xf32> to vector<16x1xf32>
    %28 = vector.broadcast %27 : vector<16x1xf32> to vector<16x12xf32>
    %29 = vector.broadcast %cst_5 : f32 to vector<16x12xf32>
    %30 = arith.select %24, %28, %29 : vector<16x12xi1>, vector<16x12xf32>
    %31 = arith.addf %22, %30 : vector<16x12xf32>
    %c0_6 = arith.constant 0 : index
    %c0_7 = arith.constant 0 : index
    %32 = vector.load %arg2[%c0_6, %c0_7] : memref<12x10xf32, #tpu.memory_space<vmem>>, vector<12x10xf32>
    %cst_8 = arith.constant dense<0.000000e+00> : vector<16x10xf32>
    %33 = tpu.matmul %31, %32, %cst_8 {dimension_numbers = #tpu.dot_dimension_numbers<[1], [0], [0], [1], [0, 0, 1, 1], [], []>} : vector<16x12xf32>, vector<12x10xf32>, vector<16x10xf32> -> vector<16x10xf32>
    %c0_9 = arith.constant 0 : index
    %c0_10 = arith.constant 0 : index
    %34 = vector.load %arg3[%c0_9, %c0_10] : memref<16x10xf32, #tpu.memory_space<vmem>>, vector<16x10xf32>
    tpu.vector_store %arg3[%c0_9, %c0_10], %33 {strides = array<i32>} : memref<16x10xf32, #tpu.memory_space<vmem>>, vector<16x10xf32>,
    return
  }
  func.func @transform_0(%arg0: i32) -> (i32, i32) {
    %c0_i32 = arith.constant 0 : i32
    %c0_i32_0 = arith.constant 0 : i32
    return %arg0, %c0_i32 : i32, i32
  }
  func.func @transform_1(%arg0: i32) -> (i32, i32) {
    %c0_i32 = arith.constant 0 : i32
    %c0_i32_0 = arith.constant 0 : i32
    %c0_i32_1 = arith.constant 0 : i32
    return %c0_i32, %c0_i32_0 : i32, i32
  }
  func.func @transform_2(%arg0: i32) -> (i32, i32) {
    %c0_i32 = arith.constant 0 : i32
    %c0_i32_0 = arith.constant 0 : i32
    return %arg0, %c0_i32 : i32, i32
  }
}

</mosaic_0001>

<llo_original>
// kernel: tpu_custom_call.1
$region0: #{tpu_custom_call.1}
  #allocation0 [shape = 'u32[]', space=smem, size = 0x4, offset = 0x4, fixed_abs, tag = 'smem constant byte address 0x4 - core index']
  #allocation1 [shape = 'u32[144,128]{1,0:T(1,128)}', space=vmem, size = 0x12000, scoped, tag = 'internal scratch']
  %s0 = inlined_call_operand.vmem [shape: f32[16,1], index: 0, kind: input, shape index: {}]
  %s1 = inlined_call_operand.vmem [shape: f32[12,10], index: 1, kind: input, shape index: {}]
  %s2 = inlined_call_operand.hbm [shape: f32[16,10], index: 2, kind: output, shape index: {}]
  %s3 = sld [smem:[#allocation0]]
  $region18: #{tpu_custom_call.1} parent=0
    _
  %s5 = ssub.s32 1, %s3
  %s6 = scalar_select 0, %s5, %s3
  $region1: #{tpu_custom_call.1} parent=0
    #allocation2 [shape = 'u8[8192]{0}', space=vmem, size = 0x2000, scoped, tag = 'output window, operand 0, single buffered']
    #allocation3 [shape = 's32[1]{0}', space=sflag, size = 0x4, scoped, tag = 'scoped memory for tpu_custom_call.1']
    %7 = vsyncpa [#allocation3], 0
    // Predicated region
    $region2: #{tpu_custom_call.1} parent=1 // pred_check
      _
    $region3: #{tpu_custom_call.1} parent=1 // pred_check_branch
      %9 = sbr.rel (0) target = $region5
    $region4: #{tpu_custom_call.1} parent=1 // pred_region
      _
    $region5: #{tpu_custom_call.1} parent=1 // pred_fallthru
      _
    // Predicated region
    $region6: #{tpu_custom_call.1} parent=1 // pred_check
      _
    $region7: #{tpu_custom_call.1} parent=1 // pred_check_branch
      %11 = sbr.rel (0) target = $region9
    $region8: #{tpu_custom_call.1} parent=1 // pred_region
      _
    $region9: #{tpu_custom_call.1} parent=1 // pred_fallthru
      _
    %v12 = vld [vmem:[%s0] sm:$0xff]
    %v13 = vld [vmem:[%s0 + $0x8] sm:$0xff]
    %v14 = vmul.f32 %v12, 12.0
    %v15 = vmul.f32 %v13, 12.0
    %v16 = vfloor.f32 %v14
    %v17 = vfloor.f32 %v15
    %v18 = vsub.f32 %v14, %v16
    %v19 = vsub.f32 %v15, %v17
    %v20 = vcvt.f32.s32.to.zero.pseudo %v16
    %v21 = vcvt.f32.s32.to.zero.pseudo %v17
    %vm22 = vcmp.gt.s32.totalorder %v20, 0
    %v23 = vsel %vm22, %v20, 0
    %vm24 = vcmp.gt.s32.totalorder %v21, 0
    %v25 = vsel %vm24, %v21, 0
    %vm26 = vcmp.lt.s32.totalorder %v23, 11
    %v27 = vsel %vm26, %v23, 11
    %vm28 = vcmp.lt.s32.totalorder %v25, 11
    %v29 = vsel %vm28, %v25, 11
    %vm30 = vcmp.eq.s32.totalorder %v27, 11
    %vm31 = vcmp.eq.s32.totalorder %v29, 11
    %v32 = vadd.s32 %v27, 1
    %v33 = vadd.s32 %v29, 1
    %v34 = vsel %vm30, 0, %v32
    %v35 = vsel %vm31, 0, %v33
    %v36 = vlaneseq
    %v37 = vand.u32 %v36, 127
    %38 = vset.pattern.permute.xlu0 0
    %39 = vperm.xlu0 %38, %v27
    %v40 = vpop.permute.xlu0 %39
    %41 = vset.pattern.permute.xlu0 0
    %42 = vperm.xlu0 %41, %v29
    %v43 = vpop.permute.xlu0 %42
    %vm44 = vcmp.eq.s32.totalorder %v37, %v40
    %vm45 = vcmp.eq.s32.totalorder %v37, %v43
    %47 = vset.pattern.permute.xlu0 0
    %48 = vperm.xlu0 %47, %v18
    %v49 = vpop.permute.xlu0 %48
    %52 = vset.pattern.permute.xlu0 0
    %53 = vperm.xlu0 %52, %v19
    %v54 = vpop.permute.xlu0 %53
    %v56 = vsel %vm44, %v49, 0.0
    %v57 = vsel %vm45, %v54, 0.0
    %58 = vset.pattern.permute.xlu0 0
    %59 = vperm.xlu0 %58, %v34
    %v60 = vpop.permute.xlu0 %59
    %61 = vset.pattern.permute.xlu0 0
    %62 = vperm.xlu0 %61, %v35
    %v63 = vpop.permute.xlu0 %62
    %vm64 = vcmp.eq.s32.totalorder %v37, %v60
    %vm65 = vcmp.eq.s32.totalorder %v37, %v63
    %v66 = vsub.f32 1.0, %v18
    %v67 = vsub.f32 1.0, %v19
    %69 = vset.pattern.permute.xlu0 0
    %70 = vperm.xlu0 %69, %v66
    %v71 = vpop.permute.xlu0 %70
    %74 = vset.pattern.permute.xlu0 0
    %75 = vperm.xlu0 %74, %v67
    %v76 = vpop.permute.xlu0 %75
    %v78 = vsel %vm64, %v71, 0.0
    %v79 = vsel %vm65, %v76, 0.0
    %v80 = vadd.f32 %v56, %v78
    %v81 = vadd.f32 %v57, %v79
    %v82 = vld [vmem:[%s1] sm:$0xff]
    %v83 = vld [vmem:[%s1 + $0x8] sm:$0xf]
    %vm84 = vcmask 97280
    %v86 = vsel %vm84, %v80, 0
    %v89 = vsel %vm84, %v81, 0
    %vm91 = vcmask 1043456
    %v93 = vsel %vm91, %v83, 0
    %95 = vmatprep.subr.mxu0 0.0
    %96 = vmatpush1.msra.mxu0 %v82
    %97 = vmatprep.subr.mxu0 0.0
    %98 = vmatpush1.msra.mxu0 %v93
    %99 = vmatprep.subr.mxu0 0.0
    %100 = vmatpush1.msra.mxu0 0.0
    %101 = vmatprep.subr.mxu0 0.0
    %102 = vmatpush1.msra.mxu0 0.0
    %103 = vmatprep.subr.mxu0 0.0
    %104 = vmatpush1.msra.mxu0 0.0
    %105 = vmatprep.subr.mxu0 0.0
    %106 = vmatpush1.msra.mxu0 0.0
    %107 = vmatprep.subr.mxu0 0.0
    %108 = vmatpush1.msra.mxu0 0.0
    %109 = vmatprep.subr.mxu0 0.0
    %110 = vmatpush1.msra.mxu0 0.0
    %111 = vmatprep.subr.mxu0 0.0
    %112 = vmatpush1.msra.mxu0 0.0
    %113 = vmatprep.subr.mxu0 0.0
    %114 = vmatpush1.msra.mxu0 0.0
    %115 = vmatprep.subr.mxu0 0.0
    %116 = vmatpush1.msra.mxu0 0.0
    %117 = vmatprep.subr.mxu0 0.0
    %118 = vmatpush1.msra.mxu0 0.0
    %119 = vmatprep.subr.mxu0 0.0
    %120 = vmatpush1.msra.mxu0 0.0
    %121 = vmatprep.subr.mxu0 0.0
    %122 = vmatpush1.msra.mxu0 0.0
    %123 = vmatprep.subr.mxu0 0.0
    %124 = vmatpush1.msra.mxu0 0.0
    %125 = vmatprep.subr.mxu0 0.0
    %126 = vmatpush1.msra.mxu0 0.0
    %127 = vmatprep.subr.mxu0 0.0
    %128 = vmatpush1.msra.mxu0 0.0
    %129 = vmatprep.subr.mxu0 0.0
    %130 = vmatpush1.msra.mxu0 0.0
    %131 = vmatprep.subr.mxu0 0.0
    %132 = vmatpush1.msra.mxu0 0.0
    %133 = vmatprep.subr.mxu0 0.0
    %134 = vmatpush1.msra.mxu0 0.0
    %135 = vmatprep.subr.mxu0 0.0
    %136 = vmatpush1.msra.mxu0 0.0
    %137 = vmatprep.subr.mxu0 0.0
    %138 = vmatpush1.msra.mxu0 0.0
    %139 = vmatprep.subr.mxu0 0.0
    %140 = vmatpush1.msra.mxu0 0.0
    %141 = vmatprep.subr.mxu0 0.0
    %142 = vmatpush1.msra.mxu0 0.0
    %143 = vmatprep.subr.mxu0 0.0
    %144 = vmatpush1.msra.mxu0 0.0
    %145 = vmatprep.subr.mxu0 0.0
    %146 = vmatpush1.msra.mxu0 0.0
    %147 = vmatprep.subr.mxu0 0.0
    %148 = vmatpush1.msra.mxu0 0.0
    %149 = vmatprep.subr.mxu0 0.0
    %150 = vmatpush1.msra.mxu0 0.0
    %151 = vmatprep.subr.mxu0 0.0
    %152 = vmatpush1.msra.mxu0 0.0
    %153 = vmatprep.subr.mxu0 0.0
    %154 = vmatpush1.msra.mxu0 0.0
    %155 = vmatprep.subr.mxu0 0.0
    %156 = vmatpush1.msra.mxu0 0.0
    %157 = vmatprep.subr.mxu0 0.0
    %158 = vmatpush1.msra.mxu0 0.0
    %159 = vmatprep.mubr.f32.mxu0 0.0
    %160 = vmatmul.mubr.f32.gmra.mrb[0].mxu0 %v86
    %v161 = vpop.f32.mrb[0].mxu0
    %v162 = vadd.f32 0.0, %v161
    %v163 = vpop.f32.mrb[0].mxu0
    %164 = vmatprep.mubr.f32.mxu0 0.0
    %165 = vmatmul.mubr.f32.gmra.mrb[0].mxu0 %v89
    %v166 = vpop.f32.mrb[0].mxu0
    %v167 = vadd.f32 0.0, %v166
    %v168 = vpop.f32.mrb[0].mxu0
    %169 = vdwg.mxu0
    %vm170 = vcmask 80896
    %171 = vst.msk [vmem:[#allocation2] sm:$0xff] %vm170, %v162
    %172 = vst.msk [vmem:[#allocation2 + $0x8] sm:$0xff] %vm170, %v167
    // Predicated region
    $region10: #{tpu_custom_call.1} parent=1 // pred_check
      _
    $region11: #{tpu_custom_call.1} parent=1 // pred_check_branch
      %174 = sbr.rel (0) target = $region13
    $region12: #{tpu_custom_call.1} parent=1 // pred_region
      %s176 = ssub.s32 256, 256
      %177 = vsyncadd [#allocation3], %s176
      %s178 = sshll.u32 [#allocation2], 4
      %s179 = int_to_ptr.vmem [resolvable:$true] %s178
      %184 = dma.vmem_to_hbm [thread:$0]  %s179, 256, %s2, [#allocation3], 128, 128, 8
    $region13: #{tpu_custom_call.1} parent=1 // pred_fallthru
      _
    // Predicated region
    $region14: #{tpu_custom_call.1} parent=1 // pred_check
      _
    $region15: #{tpu_custom_call.1} parent=1 // pred_check_branch
      %186 = sbr.rel (0) target = $region17
    $region16: #{tpu_custom_call.1} parent=1 // pred_region
      %187 = dma.done [#allocation3], 256
    $region17: #{tpu_custom_call.1} parent=1 // pred_fallthru
      _
    %188 = vsyncpa [#allocation3], 1

</llo_original>
